<compile_context>
chip_gen: v5e
topology: v5e:2x2
jax: 0.10.0
libtpu: 0.0.40
codegen_flags: <defaults>
</compile_context>

<pallas_src>
import functools

import jax
import jax.numpy as jnp
from jax.experimental import pallas as pl
from jax.experimental.pallas import tpu as pltpu

LANES = 128
TARGET_BLOCK_ROWS = 8192   # (8192, 128) f32 block = 4 MiB per input buffer
ACC_ROWS = 64              # vreg-scale accumulator: 64 independent add chains


def _dice_kernel(x_ref, t_ref, o_ref, inter_acc, sum_acc, *,
                 steps, valid_rows, block_rows, acc_rows,
                 first_masked_block, any_masked):
    c = pl.program_id(0)          # row-slice index (split across TCs on v7x)
    i = pl.program_id(1)          # step within the slice

    @pl.when(i == 0)
    def _():
        inter_acc[...] = jnp.zeros_like(inter_acc)
        sum_acc[...] = jnp.zeros_like(sum_acc)

    x = x_ref[...].astype(jnp.float32)
    t = t_ref[...].astype(jnp.float32)

    def accumulate(xv, tv):
        # Fold the (block_rows, 128) block into (acc_rows, 128) partials.  The
        # reshape keeps the aligned (acc_rows, 128) minor dims (layout-free);
        # the axis-0 sum is pure VPU adds between vreg tiles.  The two
        # denominator sums are fused: sum(x) + sum(t) == sum(x + t).
        prod = (xv * tv).reshape(-1, acc_rows, LANES)
        both = (xv + tv).reshape(-1, acc_rows, LANES)
        inter_acc[...] += jnp.sum(prod, axis=0)
        sum_acc[...] += jnp.sum(both, axis=0)

    if any_masked:
        g = c * steps + i         # unclamped global block index

        @pl.when(g < first_masked_block)
        def _():                  # steady state: full in-range block, no mask
            accumulate(x, t)

        @pl.when(g >= first_masked_block)
        def _():                  # final ragged block and/or phantom block(s)
            row = jax.lax.broadcasted_iota(jnp.int32, (block_rows, LANES), 0)
            valid = (g * block_rows + row) < valid_rows
            accumulate(jnp.where(valid, x, 0.0), jnp.where(valid, t, 0.0))
    else:
        accumulate(x, t)

    @pl.when(i == pl.num_programs(1) - 1)
    def _():
        inter = jnp.sum(inter_acc[...])
        denom = jnp.sum(sum_acc[...])
        r = jax.lax.broadcasted_iota(jnp.int32, (8, LANES), 0)
        # Per-slice partials: lane layout row0 = intersection, row1 = x+t sum.
        o_ref[0] = jnp.where(r == 0, inter, jnp.where(r == 1, denom, 0.0))


def dice_loss(inputs, targets, smooth=1.0, *, block_rows=None):
    """Pallas equivalent of DiceLoss.forward (inputs assumed already in [0,1])."""
    x = jnp.ravel(inputs)    # native dtype -> no up-cast HBM pass in the wrapper
    t = jnp.ravel(targets)
    n = x.shape[0]

    # Lane alignment: reshape to (rows, 128) is free when n % 128 == 0 (true
    # for typical NCHW tensors).  Ragged n falls back to a small zero pad.
    # TODO(synk): for n % 128 != 0, feed the raw 1-D arrays and mask the lane
    # tail in-kernel instead of this full-copy pad (rarely triggered).
    rem = n % LANES
    if rem:
        x = jnp.pad(x, (0, LANES - rem))
        t = jnp.pad(t, (0, LANES - rem))
    rows = x.shape[0] // LANES
    x2 = x.reshape(rows, LANES)
    t2 = t.reshape(rows, LANES)

    if block_rows is None:
        block_rows = rows if rows <= TARGET_BLOCK_ROWS else TARGET_BLOCK_ROWS
    block_rows = min(block_rows, rows)
    total_blocks = (rows + block_rows - 1) // block_rows

    # Two row-slices on the leading "parallel" axis: v7x shards them across its
    # 2 TensorCores; on v5e/v6e they just run sequentially.
    num_slices = 2 if total_blocks >= 2 else 1
    steps = (total_blocks + num_slices - 1) // num_slices
    have_phantom = num_slices * steps > total_blocks
    ragged = (rows % block_rows) != 0
    first_masked_block = total_blocks - 1 if ragged else total_blocks
    any_masked = ragged or have_phantom

    acc_rows = ACC_ROWS if block_rows % ACC_ROWS == 0 else block_rows

    def block_index(c, i):
        g = c * steps + i
        if have_phantom:
            # Phantom steps re-read the last real block; their contribution is
            # masked to zero in-kernel.
            g = jnp.minimum(g, total_blocks - 1)
        return g

    kernel = functools.partial(
        _dice_kernel,
        steps=steps,
        valid_rows=rows,
        block_rows=block_rows,
        acc_rows=acc_rows,
        first_masked_block=first_masked_block,
        any_masked=any_masked,
    )

    partials = pl.pallas_call(
        kernel,
        out_shape=jax.ShapeDtypeStruct((num_slices, 8, LANES), jnp.float32),
        grid_spec=pltpu.PrefetchScalarGridSpec(
            num_scalar_prefetch=0,
            grid=(num_slices, steps),
            in_specs=[
                pl.BlockSpec((block_rows, LANES),
                             lambda c, i: (block_index(c, i), 0)),
                pl.BlockSpec((block_rows, LANES),
                             lambda c, i: (block_index(c, i), 0)),
            ],
            out_specs=pl.BlockSpec((1, 8, LANES), lambda c, i: (c, 0, 0)),
            scratch_shapes=[
                pltpu.VMEM((acc_rows, LANES), jnp.float32),  # acc of x * t
                pltpu.VMEM((acc_rows, LANES), jnp.float32),  # acc of x + t
            ],
        ),
        compiler_params=pltpu.CompilerParams(
            dimension_semantics=("parallel", "arbitrary"),
            vmem_limit_bytes=48 * 1024 * 1024,
        ),
    )(x2, t2)

    # Combine per-slice partials + dice formula (O(1) work, keeps `smooth`
    # out of the kernel so it never forces a recompile).
    intersection = jnp.sum(partials[:, 0, 0])
    denom = jnp.sum(partials[:, 1, 0])
    dice = (2.0 * intersection + smooth) / (denom + smooth)
    return 1.0 - dice


def _dice_ref(inputs, targets, smooth=1.0):
    xf = jnp.ravel(inputs).astype(jnp.float32)
    tf = jnp.ravel(targets).astype(jnp.float32)
    inter = jnp.sum(xf * tf)
    return 1.0 - (2.0 * inter + smooth) / (jnp.sum(xf) + jnp.sum(tf) + smooth)


if __name__ == "__main__":
    key = jax.random.PRNGKey(0)
    k1, k2, k3, k4 = jax.random.split(key, 4)

    # --- small UNet-like case: batch=2, channels=4, spatial=16 (NCHW) ---
    inputs = jax.nn.sigmoid(jax.random.normal(k1, (2, 4, 16, 16), jnp.float32))
    targets = (jax.random.uniform(k2, (2, 4, 16, 16)) > 0.5).astype(jnp.float32)

    loss = dice_loss(inputs, targets, smooth=1.0)
    jax.block_until_ready(loss)
    ref = _dice_ref(inputs, targets, smooth=1.0)
    assert jnp.allclose(loss, ref, atol=1e-5, rtol=1e-5), (loss, ref)

    # --- larger case, default (single big block) path ---
    big_in = jax.nn.sigmoid(jax.random.normal(k3, (2, 4, 192, 192), jnp.float32))
    big_tg = (jax.random.uniform(k4, (2, 4, 192, 192)) > 0.5).astype(jnp.float32)
    loss_big = dice_loss(big_in, big_tg, smooth=1.0)
    jax.block_until_ready(loss_big)
    ref_big = _dice_ref(big_in, big_tg, smooth=1.0)
    assert jnp.allclose(loss_big, ref_big, atol=1e-4, rtol=1e-4), (loss_big, ref_big)

    # --- same data, small blocks: exercises 2 row-slices, multi-step pipeline,
    #     phantom-block clamp and gated masking ---
    loss_blk = dice_loss(big_in, big_tg, smooth=1.0, block_rows=256)
    jax.block_until_ready(loss_blk)
    assert jnp.allclose(loss_blk, ref_big, atol=1e-4, rtol=1e-4), (loss_blk, ref_big)

    # --- narrow native dtypes: bf16 activations + uint8 binary targets
    #     (kernel casts on the VPU; halves / quarters HBM traffic) ---
    loss_narrow = dice_loss(big_in.astype(jnp.bfloat16),
                            big_tg.astype(jnp.uint8), smooth=1.0)
    jax.block_until_ready(loss_narrow)
    ref_narrow = _dice_ref(big_in.astype(jnp.bfloat16),
                           big_tg.astype(jnp.uint8), smooth=1.0)
    assert jnp.allclose(loss_narrow, ref_narrow, atol=2e-3, rtol=2e-3), (
        loss_narrow, ref_narrow)

    print("KERNEL_OK")
</pallas_src>

<mosaic_0001>
module attributes {stable_mosaic.version = 11 : i64} {
  func.func @_dice_kernel(%arg0: i32, %arg1: i32, %arg2: memref<16x128xf32, #tpu.memory_space<vmem>>, %arg3: memref<16x128xf32, #tpu.memory_space<vmem>>, %arg4: memref<1x8x128xf32, #tpu.memory_space<vmem>>, %arg5: memref<16x128xf32, #tpu.memory_space<vmem>>, %arg6: memref<16x128xf32, #tpu.memory_space<vmem>>) attributes {dimension_semantics = [#tpu.dimension_semantics<parallel>, #tpu.dimension_semantics<arbitrary>], iteration_bounds = array<i64: 1, 1>, scalar_prefetch = 0 : i64, scratch_operands = 2 : i64, tpu.core_type = #tpu.core_type<tc>, window_params = [{transform_indices = @transform_0, window_bounds = array<i64: 16, 128>}, {transform_indices = @transform_1, window_bounds = array<i64: 16, 128>}, {transform_indices = @transform_2, window_bounds = array<i64: 1, 8, 128>}]} {
    %c0_i32 = arith.constant 0 : i32
    %0 = arith.cmpi eq, %arg1, %c0_i32 : i32
    %1 = arith.extui %0 : i1 to i32
    %c0_i32_0 = arith.constant 0 : i32
    %2 = arith.cmpi ne, %1, %c0_i32_0 : i32
    scf.if %2 {
      %cst_15 = arith.constant 0.000000e+00 : f32
      %20 = vector.broadcast %cst_15 : f32 to vector<16x128xf32>
      %c0_16 = arith.constant 0 : index
      %c0_17 = arith.constant 0 : index
      %21 = vector.load %arg5[%c0_16, %c0_17] : memref<16x128xf32, #tpu.memory_space<vmem>>, vector<16x128xf32>
      tpu.vector_store %arg5[%c0_16, %c0_17], %20 {strides = array<i32>} : memref<16x128xf32, #tpu.memory_space<vmem>>, vector<16x128xf32>,
      %cst_18 = arith.constant 0.000000e+00 : f32
      %22 = vector.broadcast %cst_18 : f32 to vector<16x128xf32>
      %c0_19 = arith.constant 0 : index
      %c0_20 = arith.constant 0 : index
      %23 = vector.load %arg6[%c0_19, %c0_20] : memref<16x128xf32, #tpu.memory_space<vmem>>, vector<16x128xf32>
      tpu.vector_store %arg6[%c0_19, %c0_20], %22 {strides = array<i32>} : memref<16x128xf32, #tpu.memory_space<vmem>>, vector<16x128xf32>,
    } else {
    }
    %c0 = arith.constant 0 : index
    %c0_1 = arith.constant 0 : index
    %3 = vector.load %arg2[%c0, %c0_1] : memref<16x128xf32, #tpu.memory_space<vmem>>, vector<16x128xf32>
    %c0_2 = arith.constant 0 : index
    %c0_3 = arith.constant 0 : index
    %4 = vector.load %arg3[%c0_2, %c0_3] : memref<16x128xf32, #tpu.memory_space<vmem>>, vector<16x128xf32>
    %5 = arith.mulf %3, %4 : vector<16x128xf32>
    %6 = vector.shape_cast %5 : vector<16x128xf32> to vector<1x16x128xf32>
    %7 = arith.addf %3, %4 : vector<16x128xf32>
    %8 = vector.shape_cast %7 : vector<16x128xf32> to vector<1x16x128xf32>
    %c0_4 = arith.constant 0 : index
    %c0_5 = arith.constant 0 : index
    %9 = vector.load %arg5[%c0_4, %c0_5] : memref<16x128xf32, #tpu.memory_space<vmem>>, vector<16x128xf32>
    %cst = arith.constant dense<0.000000e+00> : vector<16x128xf32>
    %10 = vector.multi_reduction <add>, %6, %cst [0] : vector<1x16x128xf32> to vector<16x128xf32>
    %11 = arith.addf %9, %10 : vector<16x128xf32>
    %c0_6 = arith.constant 0 : index
    %c0_7 = arith.constant 0 : index
    %12 = vector.load %arg5[%c0_6, %c0_7] : memref<16x128xf32, #tpu.memory_space<vmem>>, vector<16x128xf32>
    tpu.vector_store %arg5[%c0_6, %c0_7], %11 {strides = array<i32>} : memref<16x128xf32, #tpu.memory_space<vmem>>, vector<16x128xf32>,
    %c0_8 = arith.constant 0 : index
    %c0_9 = arith.constant 0 : index
    %13 = vector.load %arg6[%c0_8, %c0_9] : memref<16x128xf32, #tpu.memory_space<vmem>>, vector<16x128xf32>
    %cst_10 = arith.constant dense<0.000000e+00> : vector<16x128xf32>
    %14 = vector.multi_reduction <add>, %8, %cst_10 [0] : vector<1x16x128xf32> to vector<16x128xf32>
    %15 = arith.addf %13, %14 : vector<16x128xf32>
    %c0_11 = arith.constant 0 : index
    %c0_12 = arith.constant 0 : index
    %16 = vector.load %arg6[%c0_11, %c0_12] : memref<16x128xf32, #tpu.memory_space<vmem>>, vector<16x128xf32>
    tpu.vector_store %arg6[%c0_11, %c0_12], %15 {strides = array<i32>} : memref<16x128xf32, #tpu.memory_space<vmem>>, vector<16x128xf32>,
    %c0_i32_13 = arith.constant 0 : i32
    %17 = arith.cmpi eq, %arg1, %c0_i32_13 : i32
    %18 = arith.extui %17 : i1 to i32
    %c0_i32_14 = arith.constant 0 : i32
    %19 = arith.cmpi ne, %18, %c0_i32_14 : i32
    scf.if %19 {
      %c0_15 = arith.constant 0 : index
      %c0_16 = arith.constant 0 : index
      %20 = vector.load %arg5[%c0_15, %c0_16] : memref<16x128xf32, #tpu.memory_space<vmem>>, vector<16x128xf32>
      %21 = vector.shape_cast %20 : vector<16x128xf32> to vector<1x16x128xf32>
      %cst_17 = arith.constant dense<0.000000e+00> : vector<1xf32>
      %22 = vector.multi_reduction <add>, %21, %cst_17 [1, 2] : vector<1x16x128xf32> to vector<1xf32>
      %23 = vector.shape_cast %22 : vector<1xf32> to vector<1x1x1xf32>
      %24 = vector.extract %23[0, 0, 0] : f32 from vector<1x1x1xf32>
      %c0_18 = arith.constant 0 : index
      %c0_19 = arith.constant 0 : index
      %25 = vector.load %arg6[%c0_18, %c0_19] : memref<16x128xf32, #tpu.memory_space<vmem>>, vector<16x128xf32>
      %26 = vector.shape_cast %25 : vector<16x128xf32> to vector<1x16x128xf32>
      %cst_20 = arith.constant dense<0.000000e+00> : vector<1xf32>
      %27 = vector.multi_reduction <add>, %26, %cst_20 [1, 2] : vector<1x16x128xf32> to vector<1xf32>
      %28 = vector.shape_cast %27 : vector<1xf32> to vector<1x1x1xf32>
      %29 = vector.extract %28[0, 0, 0] : f32 from vector<1x1x1xf32>
      %30 = tpu.iota {dimensions = array<i32: 0>} : vector<8x128xi32>
      %c0_i32_21 = arith.constant 0 : i32
      %31 = vector.broadcast %c0_i32_21 : i32 to vector<8x128xi32>
      %32 = arith.cmpi eq, %30, %31 : vector<8x128xi32>
      %c1_i32 = arith.constant 1 : i32
      %33 = vector.broadcast %c1_i32 : i32 to vector<8x128xi32>
      %34 = arith.cmpi eq, %30, %33 : vector<8x128xi32>
      %cst_22 = arith.constant 0.000000e+00 : f32
      %35 = vector.broadcast %29 : f32 to vector<8x128xf32>
      %36 = vector.broadcast %cst_22 : f32 to vector<8x128xf32>
      %37 = arith.select %34, %35, %36 : vector<8x128xi1>, vector<8x128xf32>
      %38 = vector.broadcast %24 : f32 to vector<8x128xf32>
      %39 = arith.select %32, %38, %37 : vector<8x128xi1>, vector<8x128xf32>
      %c0_23 = arith.constant 0 : index
      %c0_24 = arith.constant 0 : index
      %c0_25 = arith.constant 0 : index
      %40 = vector.load %arg4[%c0_23, %c0_24, %c0_25] : memref<1x8x128xf32, #tpu.memory_space<vmem>>, vector<1x8x128xf32>
      %41 = vector.shape_cast %40 : vector<1x8x128xf32> to vector<8x128xf32>
      %42 = vector.shape_cast %39 : vector<8x128xf32> to vector<1x8x128xf32>
      tpu.vector_store %arg4[%c0_23, %c0_24, %c0_25], %42 {strides = array<i32>} : memref<1x8x128xf32, #tpu.memory_space<vmem>>, vector<1x8x128xf32>,
    } else {
    }
    return
  }
  func.func @transform_0(%arg0: i32, %arg1: i32) -> (i32, i32) {
    %c1_i32 = arith.constant 1 : i32
    %0 = arith.muli %arg0, %c1_i32 : i32
    %1 = arith.addi %0, %arg1 : i32
    %c0_i32 = arith.constant 0 : i32
    %c0_i32_0 = arith.constant 0 : i32
    return %1, %c0_i32 : i32, i32
  }
  func.func @transform_1(%arg0: i32, %arg1: i32) -> (i32, i32) {
    %c1_i32 = arith.constant 1 : i32
    %0 = arith.muli %arg0, %c1_i32 : i32
    %1 = arith.addi %0, %arg1 : i32
    %c0_i32 = arith.constant 0 : i32
    %c0_i32_0 = arith.constant 0 : i32
    return %1, %c0_i32 : i32, i32
  }
  func.func @transform_2(%arg0: i32, %arg1: i32) -> (i32, i32, i32) {
    %c0_i32 = arith.constant 0 : i32
    %c0_i32_0 = arith.constant 0 : i32
    %c0_i32_1 = arith.constant 0 : i32
    return %arg0, %c0_i32, %c0_i32_0 : i32, i32, i32
  }
}

</mosaic_0001>

<llo_original>
// kernel: tpu_custom_call.1
$region0: #{tpu_custom_call.1}
  #allocation0 [shape = 'u32[]', space=smem, size = 0x4, offset = 0x4, fixed_abs, tag = 'smem constant byte address 0x4 - core index']
  #allocation1 [shape = 'u32[72,128]{1,0:T(1,128)}', space=vmem, size = 0x9000, scoped, tag = 'internal scratch']
  #allocation2 [shape = 'f32[16,128]{1,0:T(8,128)}', space=vmem, size = 0x2000, scoped, tag = 'scratch operand']
  #allocation3 [shape = 'f32[16,128]{1,0:T(8,128)}', space=vmem, size = 0x2000, scoped, tag = 'scratch operand']
  %s0 = inlined_call_operand.hbm [shape: f32[16,128], index: 0, kind: input, shape index: {}]
  %s1 = inlined_call_operand.hbm [shape: f32[16,128], index: 1, kind: input, shape index: {}]
  %s2 = inlined_call_operand.hbm [shape: f32[1,8,128], index: 2, kind: output, shape index: {}]
  %s3 = sld [smem:[#allocation0]]
  $region34: #{tpu_custom_call.1} parent=0
    _
  %s5 = ssub.s32 1, %s3
  %s6 = scalar_select 0, %s5, %s3
  $region1: #{tpu_custom_call.1} parent=0
    #allocation4 [shape = 'u8[8192]{0}', space=vmem, size = 0x2000, scoped, tag = 'input window, operand 0, single buffered']
    #allocation5 [shape = 's32[1]{0}', space=sflag, size = 0x4, scoped, tag = 'scoped memory for tpu_custom_call.1']
    #allocation6 [shape = 's32[1]{0}', space=sflag, size = 0x4, scoped, tag = 'scoped memory for tpu_custom_call.1']
    #allocation7 [shape = 'u8[8192]{0}', space=vmem, size = 0x2000, scoped, tag = 'input window, operand 1, single buffered']
    #allocation8 [shape = 's32[1]{0}', space=sflag, size = 0x4, scoped, tag = 'scoped memory for tpu_custom_call.1']
    #allocation9 [shape = 'u8[4096]{0}', space=vmem, size = 0x1000, scoped, tag = 'output window, operand 0, single buffered']
    %7 = vsyncpa [#allocation5], 0
    %8 = vsyncpa [#allocation8], 0
    %9 = vsyncpa [#allocation6], 0
    // Predicated region
    $region2: #{tpu_custom_call.1} parent=1 // pred_check
      _
    $region3: #{tpu_custom_call.1} parent=1 // pred_check_branch
      %11 = sbr.rel (0) target = $region5
    $region4: #{tpu_custom_call.1} parent=1 // pred_region
      %s12 = sadd.s32 0, 0
      %s13 = smul.u32 2, %s12
      %15 = vsyncadd [#allocation5], 0
      %s16 = smul.addr %s13, 8
      %s17 = scalar_lea.hbm %s0, %s16
      %s18 = sshll.u32 %s17, 4
      %s19 = int_to_ptr.hbm [resolvable:$true] %s18
      %s20 = sshll.u32 [#allocation4], 4
      %s21 = int_to_ptr.vmem [resolvable:$true] %s20
      %26 = dma.hbm_to_vmem [thread:$0]  %s19, 256, %s21, [#allocation5], 128, 128, 8
    $region5: #{tpu_custom_call.1} parent=1 // pred_fallthru
      _
    // Predicated region
    $region6: #{tpu_custom_call.1} parent=1 // pred_check
      _
    $region7: #{tpu_custom_call.1} parent=1 // pred_check_branch
      %28 = sbr.rel (0) target = $region9
    $region8: #{tpu_custom_call.1} parent=1 // pred_region
      %s29 = sadd.s32 0, 0
      %s30 = smul.u32 2, %s29
      %32 = vsyncadd [#allocation8], 0
      %s33 = smul.addr %s30, 8
      %s34 = scalar_lea.hbm %s1, %s33
      %s35 = sshll.u32 %s34, 4
      %s36 = int_to_ptr.hbm [resolvable:$true] %s35
      %s37 = sshll.u32 [#allocation7], 4
      %s38 = int_to_ptr.vmem [resolvable:$true] %s37
      %43 = dma.hbm_to_vmem [thread:$0]  %s36, 256, %s38, [#allocation8], 128, 128, 8
    $region9: #{tpu_custom_call.1} parent=1 // pred_fallthru
      _
    // Predicated region
    $region10: #{tpu_custom_call.1} parent=1 // pred_check
      _
    $region11: #{tpu_custom_call.1} parent=1 // pred_check_branch
      %45 = sbr.rel (0) target = $region13
    $region12: #{tpu_custom_call.1} parent=1 // pred_region
      %47 = dma.done [#allocation5], 256
    $region13: #{tpu_custom_call.1} parent=1 // pred_fallthru
      _
    // Predicated region
    $region14: #{tpu_custom_call.1} parent=1 // pred_check
      _
    $region15: #{tpu_custom_call.1} parent=1 // pred_check_branch
      %49 = sbr.rel (0) target = $region17
    $region16: #{tpu_custom_call.1} parent=1 // pred_region
      %51 = dma.done [#allocation8], 256
    $region17: #{tpu_custom_call.1} parent=1 // pred_fallthru
      _
    %s52 = sadd.s32 0, 0
    %s53 = smul.u32 2, %s52
    %s54 = sadd.s32 0, 0
    %s55 = smul.u32 2, %s54
    %p56 = scmp.eq.s32.totalorder 0, 0
    // Predicated region
    $region18: #{tpu_custom_call.1} parent=1 // pred_check
      %p57 = pneg %p56
    $region19: #{tpu_custom_call.1} parent=1 // pred_check_branch
      %59 = sbr.rel (%p57) target = $region21
    $region20: #{tpu_custom_call.1} parent=1 // pred_region
      %60 = vst [vmem:[#allocation2] sm:$0xff] 0.0
      %61 = vst [vmem:[#allocation2 + $0x8] sm:$0xff] 0.0
      %62 = vst [vmem:[#allocation3] sm:$0xff] 0.0
      %63 = vst [vmem:[#allocation3 + $0x8] sm:$0xff] 0.0
    $region21: #{tpu_custom_call.1} parent=1 // pred_fallthru
      _
    %v64 = vld [vmem:[#allocation4] sm:$0xff]
    %v65 = vld [vmem:[#allocation4 + $0x8] sm:$0xff]
    %v66 = vld [vmem:[#allocation7] sm:$0xff]
    %v67 = vld [vmem:[#allocation7 + $0x8] sm:$0xff]
    %v68 = vmul.f32 %v64, %v66
    %v69 = vmul.f32 %v65, %v67
    %v70 = vadd.f32 %v64, %v66
    %v71 = vadd.f32 %v65, %v67
    %v72 = vld [vmem:[#allocation2] sm:$0xff]
    %v73 = vld [vmem:[#allocation2 + $0x8] sm:$0xff]
    %v74 = vadd.f32 %v68, 0.0
    %v75 = vadd.f32 %v69, 0.0
    %v76 = vadd.f32 %v72, %v74
    %v77 = vadd.f32 %v73, %v75
    %78 = vst [vmem:[#allocation2] sm:$0xff] %v76
    %79 = vst [vmem:[#allocation2 + $0x8] sm:$0xff] %v77
    %v80 = vld [vmem:[#allocation3] sm:$0xff]
    %v81 = vld [vmem:[#allocation3 + $0x8] sm:$0xff]
    %v82 = vadd.f32 %v70, 0.0
    %v83 = vadd.f32 %v71, 0.0
    %v84 = vadd.f32 %v80, %v82
    %v85 = vadd.f32 %v81, %v83
    %86 = vst [vmem:[#allocation3] sm:$0xff] %v84
    %87 = vst [vmem:[#allocation3 + $0x8] sm:$0xff] %v85
    // Predicated region
    $region22: #{tpu_custom_call.1} parent=1 // pred_check
      %p88 = pneg %p56
    $region23: #{tpu_custom_call.1} parent=1 // pred_check_branch
      %90 = sbr.rel (%p88) target = $region25
    $region24: #{tpu_custom_call.1} parent=1 // pred_region
      %v91 = vld [vmem:[#allocation2] sm:$0xff]
      %v92 = vld [vmem:[#allocation2 + $0x8] sm:$0xff]
      %v93 = vadd.f32 %v91, %v92
      %94 = vadd.xlane.f32.xlu0 %v93
      %v95 = vpop.xlane.xlu0 %94
      %v96 = vrot.slane %v95, 4
      %v97 = vadd.f32 %v95, %v96
      %v98 = vrot.slane %v97, 2
      %v99 = vadd.f32 %v97, %v98
      %v100 = vrot.slane %v99, 1
      %v101 = vadd.f32 %v99, %v100
      %s102 = vtos %v101
      %v103 = vld [vmem:[#allocation3] sm:$0xff]
      %v104 = vld [vmem:[#allocation3 + $0x8] sm:$0xff]
      %v105 = vadd.f32 %v103, %v104
      %106 = vadd.xlane.f32.xlu0 %v105
      %v107 = vpop.xlane.xlu0 %106
      %v108 = vrot.slane %v107, 4
      %v109 = vadd.f32 %v107, %v108
      %v110 = vrot.slane %v109, 2
      %v111 = vadd.f32 %v109, %v110
      %v112 = vrot.slane %v111, 1
      %v113 = vadd.f32 %v111, %v112
      %s114 = vtos %v113
      %v115 = vlaneseq
      %v116 = vshrl.u32 %v115, 7
      %vm117 = vcmp.eq.s32.totalorder %v116, 0
      %vm118 = vcmp.eq.s32.totalorder %v116, 1
      %v119 = vstv %s114
      %v120 = vsel %vm118, %v119, 0.0
      %v121 = vstv %s102
      %v122 = vsel %vm117, %v121, %v120
      %123 = vst [vmem:[#allocation9] sm:$0xff] %v122
    $region25: #{tpu_custom_call.1} parent=1 // pred_fallthru
      _
    // Predicated region
    $region26: #{tpu_custom_call.1} parent=1 // pred_check
      _
    $region27: #{tpu_custom_call.1} parent=1 // pred_check_branch
      %125 = sbr.rel (0) target = $region29
    $region28: #{tpu_custom_call.1} parent=1 // pred_region
      %127 = vsyncadd [#allocation6], 0
      %s129 = sshll.u32 [#allocation9], 4
      %s130 = int_to_ptr.vmem [resolvable:$true] %s129
      %s131 = sshll.u32 %s2, 4
      %s132 = int_to_ptr.hbm [resolvable:$true] %s131
      %134 = dma.vmem_to_hbm [thread:$0]  %s130, 128, %s132, [#allocation6]
    $region29: #{tpu_custom_call.1} parent=1 // pred_fallthru
      _
    // Predicated region
    $region30: #{tpu_custom_call.1} parent=1 // pred_check
      _
    $region31: #{tpu_custom_call.1} parent=1 // pred_check_branch
      %136 = sbr.rel (0) target = $region33
    $region32: #{tpu_custom_call.1} parent=1 // pred_region
      %138 = dma.done [#allocation6], 128
    $region33: #{tpu_custom_call.1} parent=1 // pred_fallthru
      _
    %139 = vsyncpa [#allocation5], 1
    %140 = vsyncpa [#allocation8], 1
    %141 = vsyncpa [#allocation6], 1

</llo_original>
